<compile_context>
chip_gen: v6e
topology: v6e:2x2x1
jax: 0.10.0
libtpu: 0.0.40
codegen_flags: <defaults>
</compile_context>

<pallas_src>
import functools

import numpy as np
import jax
import jax.numpy as jnp
from jax.experimental import pallas as pl
from jax.experimental.pallas import tpu as pltpu


def _round_up(x, m):
    return (x + m - 1) // m * m


def _matmul_bn_relu_kernel(p_ref, w_ref, sb_ref, o_ref):
    """Fused (im2col-patches @ folded-weight) + BatchNorm(affine) + ReLU.

    p_ref : (1, tm, Kp)      bf16 im2col patch band (all KH*KW taps folded
                             into the contraction dim, zero-padded to Kp)
    w_ref : (Kp, Cout_p)     bf16 folded conv weight
    sb_ref: (2, Cout_p)      f32; row 0 = gamma/sqrt(var+eps), row 1 = beta - mean*scale
    o_ref : (1, tm, Cout_p)  f32 output band (lane-dense, unmasked stores)
    """
    # Single MXU pass; accumulator stays in vregs / MRB (no VMEM round-trip).
    acc = jnp.dot(p_ref[0], w_ref[...], preferred_element_type=jnp.float32)
    y = acc * sb_ref[0] + sb_ref[1]            # fused BatchNorm (f32)
    o_ref[0] = jnp.maximum(y, 0.0).astype(o_ref.dtype)   # ReLU, lane-dense store


def conv_module_forward(x_nchw, weight_oihw, bn_gamma, bn_beta, bn_mean,
                        bn_var, *, padding, dilation, eps=1e-5,
                        compute_dtype=jnp.bfloat16, tm=128):
    """Forward of _ConvModule. x_nchw: (N, Cin, H, W). Returns (N, Cout, H', W')."""
    n, cin, h, w = x_nchw.shape
    cout, _, kh, kw = weight_oihw.shape
    d = dilation

    h_out = h + 2 * padding - d * (kh - 1)
    w_out = w + 2 * padding - d * (kw - 1)
    m = h_out * w_out

    k_taps = kh * kw * cin
    kp = _round_up(k_taps, 128)           # lane-dense folded contraction dim
    cout_p = _round_up(cout, 128)         # lane-dense output dim
    mp = _round_up(m, tm)                 # M padded to a whole number of bands

    # --- wrapper glue (plain JAX): im2col, padding, BN folding -------------
    # TODO(synk): keep the surrounding model in NHWC to avoid this transpose.
    x_nhwc = jnp.transpose(x_nchw, (0, 2, 3, 1))
    x_sp = jnp.pad(x_nhwc, ((0, 0), (padding, padding), (padding, padding), (0, 0)))

    # Fold every (kh, kw) tap into the contraction dim.  Patch layout is
    # [(kh, kw) major, cin minor], matching the weight reshape below.
    windows = [x_sp[:, ih * d:ih * d + h_out, iw * d:iw * d + w_out, :]
               for ih in range(kh) for iw in range(kw)]
    patches = jnp.concatenate(windows, axis=-1).reshape(n, m, k_taps)
    patches = jnp.pad(patches, ((0, 0), (0, mp - m), (0, kp - k_taps)))
    patches = patches.astype(compute_dtype)                       # (N, Mp, Kp)

    w2 = jnp.transpose(weight_oihw, (2, 3, 1, 0)).reshape(k_taps, cout)
    w2 = jnp.pad(w2, ((0, kp - k_taps), (0, cout_p - cout)))
    w2 = w2.astype(compute_dtype)                                 # (Kp, Cout_p)

    scale = bn_gamma / jnp.sqrt(bn_var + eps)
    bias = bn_beta - bn_mean * scale
    scale_bias = jnp.stack([
        jnp.pad(scale, (0, cout_p - cout), constant_values=1.0),
        jnp.pad(bias, (0, cout_p - cout)),
    ]).astype(jnp.float32)                                        # (2, Cout_p)

    grid = (n, mp // tm)
    itemsize = np.dtype(compute_dtype).itemsize

    # Tight VMEM budget: double-buffered in/out blocks + grid-invariant operands.
    in_block = tm * kp * itemsize
    out_block = tm * cout_p * 4
    w_bytes = kp * cout_p * itemsize
    sb_bytes = 8 * cout_p * 4
    vmem_bytes = 2 * (in_block + out_block) + 2 * (w_bytes + sb_bytes)
    vmem_bytes = min(vmem_bytes + (4 << 20), 32 * 1024 * 1024)

    cost = pl.CostEstimate(
        flops=2 * n * mp * kp * cout_p,
        transcendentals=0,
        bytes_accessed=(n * mp * kp * itemsize + w_bytes + 2 * cout_p * 4
                        + n * mp * cout_p * 4),
    )

    out_padded = pl.pallas_call(
        _matmul_bn_relu_kernel,
        out_shape=jax.ShapeDtypeStruct((n, mp, cout_p), jnp.float32),
        grid=grid,
        in_specs=[
            pl.BlockSpec((1, tm, kp), lambda b, i: (b, i, 0)),
            # Grid-invariant operands (constant index_map -> no re-DMA per step).
            pl.BlockSpec((kp, cout_p), lambda b, i: (0, 0)),
            pl.BlockSpec((2, cout_p), lambda b, i: (0, 0)),
        ],
        out_specs=pl.BlockSpec((1, tm, cout_p), lambda b, i: (b, i, 0)),
        compiler_params=pltpu.CompilerParams(
            dimension_semantics=("parallel", "parallel"),
            vmem_limit_bytes=vmem_bytes,
        ),
        cost_estimate=cost,
    )(patches, w2, scale_bias)

    out_nhwc = out_padded[:, :m, :cout].reshape(n, h_out, w_out, cout)
    return jnp.transpose(out_nhwc, (0, 3, 1, 2))       # back to NCHW


def _reference_forward(x_nchw, weight_oihw, gamma, beta, mean, var, *,
                       padding, dilation, eps=1e-5, compute_dtype=jnp.bfloat16):
    # Reference uses the same bf16-rounded operands (kernel computes on the
    # native bf16 MXU path with f32 accumulation).
    xr = x_nchw.astype(compute_dtype).astype(jnp.float32)
    wr = weight_oihw.astype(compute_dtype).astype(jnp.float32)
    conv = jax.lax.conv_general_dilated(
        xr, wr,
        window_strides=(1, 1),
        padding=((padding, padding), (padding, padding)),
        rhs_dilation=(dilation, dilation),
        dimension_numbers=("NCHW", "OIHW", "NCHW"),
        precision=jax.lax.Precision.HIGHEST)
    scale = gamma / jnp.sqrt(var + eps)
    bn = conv * scale[None, :, None, None] + (beta - mean * scale)[None, :, None, None]
    return jnp.maximum(bn, 0.0)


if __name__ == "__main__":
    # Small shapes consistent with the module: an ASPP-style dilated 3x3 branch.
    N, Cin, H, W = 2, 8, 16, 16
    Cout, K = 16, 3
    dilation = 2
    padding = 2          # padding == dilation keeps spatial size for 3x3

    key = jax.random.PRNGKey(0)
    kx, kw_key = jax.random.split(key)

    x = jax.random.normal(kx, (N, Cin, H, W), dtype=jnp.float32)

    # kaiming_normal_ (fan_in, gain=sqrt(2)) on Conv2d weight (Cout, Cin, K, K)
    fan_in = Cin * K * K
    std = (2.0 / fan_in) ** 0.5
    weight = jax.random.normal(kw_key, (Cout, Cin, K, K), dtype=jnp.float32) * std

    # BatchNorm params per _init_weight: weight=1, bias=0; running stats default.
    gamma = jnp.ones((Cout,), jnp.float32)
    beta = jnp.zeros((Cout,), jnp.float32)
    run_mean = jnp.zeros((Cout,), jnp.float32)
    run_var = jnp.ones((Cout,), jnp.float32)

    out = conv_module_forward(x, weight, gamma, beta, run_mean, run_var,
                              padding=padding, dilation=dilation)
    out = jax.block_until_ready(out)

    ref = _reference_forward(x, weight, gamma, beta, run_mean, run_var,
                             padding=padding, dilation=dilation)
    assert out.shape == (N, Cout, H, W), out.shape
    max_err = float(jnp.max(jnp.abs(out - ref)))
    assert jnp.allclose(out, ref, atol=2e-3, rtol=2e-3), max_err

    print("KERNEL_OK")
</pallas_src>

<mosaic_0001>
module attributes {stable_mosaic.version = 11 : i64} {
  func.func @_matmul_bn_relu_kernel(%arg0: i32, %arg1: i32, %arg2: memref<1x128x128xbf16, #tpu.memory_space<vmem>>, %arg3: memref<128x128xbf16, #tpu.memory_space<vmem>>, %arg4: memref<2x128xf32, #tpu.memory_space<vmem>>, %arg5: memref<1x128x128xf32, #tpu.memory_space<vmem>>) attributes {dimension_semantics = [#tpu.dimension_semantics<parallel>, #tpu.dimension_semantics<parallel>], iteration_bounds = array<i64: 2, 2>, scalar_prefetch = 0 : i64, scratch_operands = 0 : i64, tpu.core_type = #tpu.core_type<tc>, window_params = [{transform_indices = @transform_0, window_bounds = array<i64: 1, 128, 128>}, {pipeline_mode = #tpu.pipeline_mode<synchronous>, transform_indices = @transform_1, window_bounds = array<i64: 128, 128>}, {pipeline_mode = #tpu.pipeline_mode<synchronous>, transform_indices = @transform_2, window_bounds = array<i64: 2, 128>}, {transform_indices = @transform_3, window_bounds = array<i64: 1, 128, 128>}]} {
    %c0 = arith.constant 0 : index
    %c0_0 = arith.constant 0 : index
    %c0_1 = arith.constant 0 : index
    %0 = vector.load %arg2[%c0, %c0_0, %c0_1] : memref<1x128x128xbf16, #tpu.memory_space<vmem>>, vector<1x128x128xbf16>
    %1 = vector.shape_cast %0 : vector<1x128x128xbf16> to vector<128x128xbf16>
    %c0_2 = arith.constant 0 : index
    %c0_3 = arith.constant 0 : index
    %2 = vector.load %arg3[%c0_2, %c0_3] : memref<128x128xbf16, #tpu.memory_space<vmem>>, vector<128x128xbf16>
    %cst = arith.constant dense<0.000000e+00> : vector<128x128xf32>
    %3 = tpu.matmul %1, %2, %cst {dimension_numbers = #tpu.dot_dimension_numbers<[1], [0], [0], [1], [0, 0, 1, 1], [], []>} : vector<128x128xbf16>, vector<128x128xbf16>, vector<128x128xf32> -> vector<128x128xf32>
    %c0_4 = arith.constant 0 : index
    %c0_5 = arith.constant 0 : index
    %4 = vector.load %arg4[%c0_4, %c0_5] : memref<2x128xf32, #tpu.memory_space<vmem>>, vector<1x128xf32>
    %5 = vector.shape_cast %4 : vector<1x128xf32> to vector<128xf32>
    %6 = vector.shape_cast %5 : vector<128xf32> to vector<1x128xf32>
    %7 = vector.broadcast %6 : vector<1x128xf32> to vector<128x128xf32>
    %8 = arith.mulf %3, %7 : vector<128x128xf32>
    %c1 = arith.constant 1 : index
    %c0_6 = arith.constant 0 : index
    %9 = vector.load %arg4[%c1, %c0_6] : memref<2x128xf32, #tpu.memory_space<vmem>>, vector<1x128xf32>
    %10 = vector.shape_cast %9 : vector<1x128xf32> to vector<128xf32>
    %11 = vector.shape_cast %10 : vector<128xf32> to vector<1x128xf32>
    %12 = vector.broadcast %11 : vector<1x128xf32> to vector<128x128xf32>
    %13 = arith.addf %8, %12 : vector<128x128xf32>
    %cst_7 = arith.constant 0.000000e+00 : f32
    %14 = vector.broadcast %cst_7 : f32 to vector<128x128xf32>
    %15 = arith.maximumf %13, %14 : vector<128x128xf32>
    %c0_8 = arith.constant 0 : index
    %c0_9 = arith.constant 0 : index
    %c0_10 = arith.constant 0 : index
    %16 = vector.load %arg5[%c0_8, %c0_9, %c0_10] : memref<1x128x128xf32, #tpu.memory_space<vmem>>, vector<1x128x128xf32>
    %17 = vector.shape_cast %16 : vector<1x128x128xf32> to vector<128x128xf32>
    %18 = vector.shape_cast %15 : vector<128x128xf32> to vector<1x128x128xf32>
    tpu.vector_store %arg5[%c0_8, %c0_9, %c0_10], %18 {strides = array<i32>} : memref<1x128x128xf32, #tpu.memory_space<vmem>>, vector<1x128x128xf32>,
    return
  }
  func.func @transform_0(%arg0: i32, %arg1: i32) -> (i32, i32, i32) {
    %c0_i32 = arith.constant 0 : i32
    %c0_i32_0 = arith.constant 0 : i32
    return %arg0, %arg1, %c0_i32 : i32, i32, i32
  }
  func.func @transform_1(%arg0: i32, %arg1: i32) -> (i32, i32) {
    %c0_i32 = arith.constant 0 : i32
    %c0_i32_0 = arith.constant 0 : i32
    %c0_i32_1 = arith.constant 0 : i32
    return %c0_i32, %c0_i32_0 : i32, i32
  }
  func.func @transform_2(%arg0: i32, %arg1: i32) -> (i32, i32) {
    %c0_i32 = arith.constant 0 : i32
    %c0_i32_0 = arith.constant 0 : i32
    %c0_i32_1 = arith.constant 0 : i32
    return %c0_i32, %c0_i32_0 : i32, i32
  }
  func.func @transform_3(%arg0: i32, %arg1: i32) -> (i32, i32, i32) {
    %c0_i32 = arith.constant 0 : i32
    %c0_i32_0 = arith.constant 0 : i32
    return %arg0, %arg1, %c0_i32 : i32, i32, i32
  }
}

</mosaic_0001>

<llo_original>
// kernel: tpu_custom_call.1
$region0: #{tpu_custom_call.1}
  #allocation0 [shape = 'u32[]', space=smem, size = 0x4, offset = 0x4, fixed_abs, tag = 'smem constant byte address 0x4 - core index']
  #allocation1 [shape = 'u32[144,128]{1,0:T(1,128)}', space=vmem, size = 0x12000, scoped, tag = 'internal scratch']
  %s0 = inlined_call_operand.hbm [shape: bf16[2,256,128], index: 0, kind: input, shape index: {}]
  %s1 = inlined_call_operand.hbm [shape: bf16[128,128], index: 1, kind: input, shape index: {}]
  %s2 = inlined_call_operand.vmem [shape: f32[2,128], index: 2, kind: input, shape index: {}]
  %s3 = inlined_call_operand.hbm [shape: f32[2,256,128], index: 3, kind: output, shape index: {}]
  %s4 = sld [smem:[#allocation0]]
  $region53: #{tpu_custom_call.1} parent=0
    _
  %s6 = ssub.s32 1, %s4
  %s7 = scalar_select 0, %s6, %s4
  $region1: #{tpu_custom_call.1} parent=0
    #allocation2 [shape = 'u8[65536]{0}', space=vmem, size = 0x10000, scoped, tag = 'input window, operand 0']
    #allocation3 [shape = 's32[2]{0}', space=sflag, size = 0x8, scoped, tag = 'scoped memory for tpu_custom_call.1']
    #allocation4 [shape = 's32[2]{0}', space=sflag, size = 0x8, scoped, tag = 'scoped memory for tpu_custom_call.1']
    #allocation5 [shape = 'u8[32768]{0}', space=vmem, size = 0x8000, scoped, tag = 'input window, operand 1, single buffered']
    #allocation6 [shape = 's32[1]{0}', space=sflag, size = 0x4, scoped, tag = 'scoped memory for tpu_custom_call.1']
    #allocation7 [shape = 'u8[131072]{0}', space=vmem, size = 0x20000, scoped, tag = 'output window, operand 0']
    %8 = vsyncpa [#allocation3], 0
    %s9 = scalar_lea.sflag [#allocation3], 1
    %10 = vsyncpa %s9, 0
    %11 = vsyncpa [#allocation6], 0
    %12 = vsyncpa [#allocation4], 0
    %s13 = scalar_lea.sflag [#allocation4], 1
    %14 = vsyncpa %s13, 0
    loop: start=0, step=1, limit=6
    $region2: #{tpu_custom_call.1} parent=1 // loop_pre_header
      _
    $region3: #{tpu_custom_call.1} parent=1 // loop_header
      %s16 = sphi 0, %s20
      %p17 = scmp.ge.s32.totalorder %s16, 6
      %s23 = sphi 0, %s35
      %s24 = sphi 0, %s31
      %s25 = sphi 0, %s23
      %s26 = sphi 0, %s24
      %s27 = sphi 0, %s25
      %s28 = sphi 0, %s26
      %s40 = sphi 0, %s42
      %s43 = sphi 0, %s40
      %s44 = sphi 0, %s43
      %s60 = sphi 0, %s44
      %s64 = sphi 0, %s64
      %s66 = sphi 0, %s64
      %s67 = sphi 0, %s66
      %s81 = sphi 0, %s67
      %s85 = sphi 0, %s85
      %s87 = sphi 0, %s85
      %s88 = sphi 0, %s87
      %s102 = sphi 0, %s88
      %s110 = sphi 0, %s112
      %s113 = sphi 0, %s110
      %s114 = sphi 0, %s113
      %s130 = sphi 0, %s114
    $region4: #{tpu_custom_call.1} parent=1 // loop_header_branch
      %19 = sbr.rel (%p17) target = $region8
    $region5: #{tpu_custom_call.1} parent=1 // loop_body
      %s21 = ssub.s32 %s16, 1
      %s22 = ssub.s32 %s16, 2
      %s29 = sadd.s32 1, %s24
      %p30 = scmp.ge.s32.totalorder %s29, 2
      %s31 = scalar_select %p30, 0, %s29
      %s32 = sadd.s32 1, %s23
      %s33 = scalar_select %p30, %s32, %s23
      %p34 = scmp.ge.s32.totalorder %s33, 2
      %s35 = scalar_select %p34, 0, %s33
      %s36 = ssub.s32 %s23, %s35
      %s37 = ssub.s32 %s24, %s31
      %s38 = sor.u32 %s36, %s37
      %p39 = scmp.eq.s32.totalorder %s38, 0
      %s41 = sadd.s32 %s40, 1
      %s42 = scalar_select %p39, %s40, %s41
      %p45 = pneg %p39
      %p46 = scmp.eq.s32.totalorder %s16, 3
      %p47 = por %p45, %p46
      %p48 = scmp.ne.s32.totalorder %s40, %s43
      %p49 = scmp.eq.s32.totalorder %s16, 0
      %p50 = por %p48, %p49
      %p51 = scmp.ne.s32.totalorder %s40, %s43
      %p52 = scmp.eq.s32.totalorder %s21, 3
      %p53 = por %p51, %p52
      %p54 = scmp.ne.s32.totalorder %s43, %s44
      %p55 = scmp.eq.s32.totalorder %s21, 0
      %p56 = por %p54, %p55
      %p57 = scmp.ne.s32.totalorder %s43, %s44
      %p58 = scmp.eq.s32.totalorder %s22, 3
      %p59 = por %p57, %p58
      %p61 = scmp.ne.s32.totalorder %s44, %s60
      %p62 = scmp.eq.s32.totalorder %s22, 0
      %p63 = por %p61, %p62
      %s65 = sadd.s32 %s64, 1
      %p68 = scmp.eq.s32.totalorder %s16, 3
      %p69 = scmp.ne.s32.totalorder %s64, %s66
      %p70 = scmp.eq.s32.totalorder %s16, 0
      %p71 = por %p69, %p70
      %p72 = scmp.ne.s32.totalorder %s64, %s66
      %p73 = scmp.eq.s32.totalorder %s21, 3
      %p74 = por %p72, %p73
      %p75 = scmp.ne.s32.totalorder %s66, %s67
      %p76 = scmp.eq.s32.totalorder %s21, 0
      %p77 = por %p75, %p76
      %p78 = scmp.ne.s32.totalorder %s66, %s67
      %p79 = scmp.eq.s32.totalorder %s22, 3
      %p80 = por %p78, %p79
      %p82 = scmp.ne.s32.totalorder %s67, %s81
      %p83 = scmp.eq.s32.totalorder %s22, 0
      %p84 = por %p82, %p83
      %s86 = sadd.s32 %s85, 1
      %p89 = scmp.eq.s32.totalorder %s16, 3
      %p90 = scmp.ne.s32.totalorder %s85, %s87
      %p91 = scmp.eq.s32.totalorder %s16, 0
      %p92 = por %p90, %p91
      %p93 = scmp.ne.s32.totalorder %s85, %s87
      %p94 = scmp.eq.s32.totalorder %s21, 3
      %p95 = por %p93, %p94
      %p96 = scmp.ne.s32.totalorder %s87, %s88
      %p97 = scmp.eq.s32.totalorder %s21, 0
      %p98 = por %p96, %p97
      %p99 = scmp.ne.s32.totalorder %s87, %s88
      %p100 = scmp.eq.s32.totalorder %s22, 3
      %p101 = por %p99, %p100
      %p103 = scmp.ne.s32.totalorder %s88, %s102
      %p104 = scmp.eq.s32.totalorder %s22, 0
      %p105 = por %p103, %p104
      %s106 = ssub.s32 %s23, %s35
      %s107 = ssub.s32 %s24, %s31
      %s108 = sor.u32 %s106, %s107
      %p109 = scmp.eq.s32.totalorder %s108, 0
      %s111 = sadd.s32 %s110, 1
      %s112 = scalar_select %p109, %s110, %s111
      %p115 = pneg %p109
      %p116 = scmp.eq.s32.totalorder %s16, 3
      %p117 = por %p115, %p116
      %p118 = scmp.ne.s32.totalorder %s110, %s113
      %p119 = scmp.eq.s32.totalorder %s16, 0
      %p120 = por %p118, %p119
      %p121 = scmp.ne.s32.totalorder %s110, %s113
      %p122 = scmp.eq.s32.totalorder %s21, 3
      %p123 = por %p121, %p122
      %p124 = scmp.ne.s32.totalorder %s113, %s114
      %p125 = scmp.eq.s32.totalorder %s21, 0
      %p126 = por %p124, %p125
      %p127 = scmp.ne.s32.totalorder %s113, %s114
      %p128 = scmp.eq.s32.totalorder %s22, 3
      %p129 = por %p127, %p128
      %p131 = scmp.ne.s32.totalorder %s114, %s130
      %p132 = scmp.eq.s32.totalorder %s22, 0
      %p133 = por %p131, %p132
      %p134 = scmp.le.s32.totalorder 1, %s16
      %p135 = scmp.lt.s32.totalorder %s16, 5
      %p136 = pnand %p134, %p135
      %p137 = pneg %p136
      // Predicated region
      $region9: #{tpu_custom_call.1} parent=5 // pred_check
        _
      $region10: #{tpu_custom_call.1} parent=5 // pred_check_branch
        %139 = sbr.rel (%p136) target = $region12
      $region11: #{tpu_custom_call.1} parent=5 // pred_region
        %s140 = ssub.s32 %s16, 1
        // Predicated region
        $region13: #{tpu_custom_call.1} parent=11 // pred_check
          %p141 = pneg %p77
        $region14: #{tpu_custom_call.1} parent=11 // pred_check_branch
          %143 = sbr.rel (%p141) target = $region16
        $region15: #{tpu_custom_call.1} parent=11 // pred_region
          %s145 = ssub.s32 1024, 1024
          %146 = vsyncadd [#allocation6], %s145
          %s147 = sshll.u32 [#allocation5], 4
          %s148 = int_to_ptr.vmem [resolvable:$true] %s147
          %153 = dma.hbm_to_vmem [thread:$0]  %s1, 1024, %s148, [#allocation6], 64, 64, 4
        $region16: #{tpu_custom_call.1} parent=11 // pred_fallthru
          _
        // Predicated region
        $region17: #{tpu_custom_call.1} parent=11 // pred_check
          %p154 = pneg %p98
        $region18: #{tpu_custom_call.1} parent=11 // pred_check_branch
          %156 = sbr.rel (%p154) target = $region20
        $region19: #{tpu_custom_call.1} parent=11 // pred_region
          _
        $region20: #{tpu_custom_call.1} parent=11 // pred_fallthru
          _
      $region12: #{tpu_custom_call.1} parent=5 // pred_fallthru
        _
      %p157 = scmp.lt.s32.totalorder %s16, 4
      // Predicated region
      $region21: #{tpu_custom_call.1} parent=5 // pred_check
        %p158 = pneg %p157
      $region22: #{tpu_custom_call.1} parent=5 // pred_check_branch
        %160 = sbr.rel (%p158) target = $region24
      $region23: #{tpu_custom_call.1} parent=5 // pred_region
        // Predicated region
        $region25: #{tpu_custom_call.1} parent=23 // pred_check
          %p161 = pneg %p50
        $region26: #{tpu_custom_call.1} parent=23 // pred_check_branch
          %163 = sbr.rel (%p161) target = $region28
        $region27: #{tpu_custom_call.1} parent=23 // pred_region
          %s164 = sand.u32 %s40, 1
          %s165 = scalar_lea.sflag [#allocation3], %s164
          %s166 = sand.u32 %s40, 1
          %s167 = smul.addr %s166, 64
          %s168 = scalar_lea.vmem [#allocation2], %s167
          %s169 = smul.u32 16, %s24
          %s171 = ssub.s32 1024, 1024
          %172 = vsyncadd %s165, %s171
          %s173 = smul.addr %s23, 32
          %s174 = sadd.s32 %s169, %s173
          %s175 = smul.addr %s174, 64
          %s176 = scalar_lea.hbm %s0, %s175
          %s177 = sshll.u32 %s168, 4
          %s178 = int_to_ptr.vmem [resolvable:$true] %s177
          %183 = dma.hbm_to_vmem [thread:$0]  %s176, 1024, %s178, %s165, 64, 64, 4
        $region28: #{tpu_custom_call.1} parent=23 // pred_fallthru
          _
      $region24: #{tpu_custom_call.1} parent=5 // pred_fallthru
        _
      %p184 = scmp.le.s32.totalorder 1, %s16
      %p185 = scmp.lt.s32.totalorder %s16, 5
      %p186 = pnand %p184, %p185
      %p187 = pneg %p186
      // Predicated region
      $region29: #{tpu_custom_call.1} parent=5 // pred_check
        _
      $region30: #{tpu_custom_call.1} parent=5 // pred_check_branch
        %189 = sbr.rel (%p186) target = $region32
      $region31: #{tpu_custom_call.1} parent=5 // pred_region
        %s190 = ssub.s32 %s16, 1
        %s191 = sand.u32 %s43, 1
        %s192 = scalar_lea.sflag [#allocation3], %s191
        %s193 = sand.u32 %s43, 1
        %s194 = smul.addr %s193, 64
        %s195 = scalar_lea.vmem [#allocation2], %s194
        // Predicated region
        $region33: #{tpu_custom_call.1} parent=31 // pred_check
          %p196 = pneg %p56
        $region34: #{tpu_custom_call.1} parent=31 // pred_check_branch
          %198 = sbr.rel (%p196) target = $region36
        $region35: #{tpu_custom_call.1} parent=31 // pred_region
          %199 = dma.done %s192, 1024
        $region36: #{tpu_custom_call.1} parent=31 // pred_fallthru
          _
        // Predicated region
        $region37: #{tpu_custom_call.1} parent=31 // pred_check
          %p200 = pneg %p77
        $region38: #{tpu_custom_call.1} parent=31 // pred_check_branch
          %202 = sbr.rel (%p200) target = $region40
        $region39: #{tpu_custom_call.1} parent=31 // pred_region
          %203 = dma.done [#allocation6], 1024
        $region40: #{tpu_custom_call.1} parent=31 // pred_fallthru
          _
        %s204 = sand.u32 %s43, 1
        %s205 = scalar_lea.sflag [#allocation3], %s204
        %s206 = sand.u32 %s43, 1
        %s207 = smul.addr %s206, 64
        %s208 = scalar_lea.vmem [#allocation2], %s207
        %p209 = pneg %p56
        %p210 = pneg %p53
        %p211 = pneg %p77
        %p212 = pneg %p74
        %p213 = pneg %p98
        %p214 = pneg %p95
        %p215 = pneg %p126
        %p216 = pneg %p123
        %s217 = sand.u32 %s113, 1
        %s218 = scalar_lea.sflag [#allocation4], %s217
        %s219 = sand.u32 %s113, 1
        %s220 = smul.addr %s219, 128
        %s221 = scalar_lea.vmem [#allocation7], %s220
        %s222 = smul.u32 16, %s26
        %s223 = smul.u32 16, %s26
        %v225 = vld [vmem:[%s195] sm:$0xf]
        %v226 = vld [vmem:[%s195 + $0x4] sm:$0xf]
        %v227 = vld [vmem:[%s195 + $0x8] sm:$0xf]
        %v228 = vld [vmem:[%s195 + $0xc] sm:$0xf]
        %v229 = vld [vmem:[%s195 + $0x10] sm:$0xf]
        %v230 = vld [vmem:[%s195 + $0x14] sm:$0xf]
        %v231 = vld [vmem:[%s195 + $0x18] sm:$0xf]
        %v232 = vld [vmem:[%s195 + $0x1c] sm:$0xf]
        %v233 = vld [vmem:[%s195 + $0x20] sm:$0xf]
        %v234 = vld [vmem:[%s195 + $0x24] sm:$0xf]
        %v235 = vld [vmem:[%s195 + $0x28] sm:$0xf]
        %v236 = vld [vmem:[%s195 + $0x2c] sm:$0xf]
        %v237 = vld [vmem:[%s195 + $0x30] sm:$0xf]
        %v238 = vld [vmem:[%s195 + $0x34] sm:$0xf]
        %v239 = vld [vmem:[%s195 + $0x38] sm:$0xf]
        %v240 = vld [vmem:[%s195 + $0x3c] sm:$0xf]
        %v241 = vld [vmem:[#allocation5] sm:$0xf]
        %v242 = vld [vmem:[#allocation5 + $0x4] sm:$0xf]
        %v243 = vld [vmem:[#allocation5 + $0x8] sm:$0xf]
        %v244 = vld [vmem:[#allocation5 + $0xc] sm:$0xf]
        %v245 = vld [vmem:[#allocation5 + $0x10] sm:$0xf]
        %v246 = vld [vmem:[#allocation5 + $0x14] sm:$0xf]
        %v247 = vld [vmem:[#allocation5 + $0x18] sm:$0xf]
        %v248 = vld [vmem:[#allocation5 + $0x1c] sm:$0xf]
        %v249 = vld [vmem:[#allocation5 + $0x20] sm:$0xf]
        %v250 = vld [vmem:[#allocation5 + $0x24] sm:$0xf]
        %v251 = vld [vmem:[#allocation5 + $0x28] sm:$0xf]
        %v252 = vld [vmem:[#allocation5 + $0x2c] sm:$0xf]
        %v253 = vld [vmem:[#allocation5 + $0x30] sm:$0xf]
        %v254 = vld [vmem:[#allocation5 + $0x34] sm:$0xf]
        %v255 = vld [vmem:[#allocation5 + $0x38] sm:$0xf]
        %v256 = vld [vmem:[#allocation5 + $0x3c] sm:$0xf]
        %v273 = vunpack.c.l.b16 %v225
        %v274 = vunpack.c.l.b16 %v226
        %v275 = vunpack.c.l.b16 %v227
        %v276 = vunpack.c.l.b16 %v228
        %v277 = vunpack.c.l.b16 %v229
        %v278 = vunpack.c.l.b16 %v230
        %v279 = vunpack.c.l.b16 %v231
        %v280 = vunpack.c.l.b16 %v232
        %v281 = vunpack.c.l.b16 %v233
        %v282 = vunpack.c.l.b16 %v234
        %v283 = vunpack.c.l.b16 %v235
        %v284 = vunpack.c.l.b16 %v236
        %v285 = vunpack.c.l.b16 %v237
        %v286 = vunpack.c.l.b16 %v238
        %v287 = vunpack.c.l.b16 %v239
        %v288 = vunpack.c.l.b16 %v240
        %v289 = vpack.c.b16 %v274, %v273
        %v290 = vpack.c.b16 %v276, %v275
        %v291 = vpack.c.b16 %v278, %v277
        %v292 = vpack.c.b16 %v280, %v279
        %v293 = vpack.c.b16 %v282, %v281
        %v294 = vpack.c.b16 %v284, %v283
        %v295 = vpack.c.b16 %v286, %v285
        %v296 = vpack.c.b16 %v288, %v287
        %v321 = vunpack.c.l.b16 %v241
        %v322 = vunpack.c.l.b16 %v242
        %v323 = vunpack.c.l.b16 %v243
        %v324 = vunpack.c.l.b16 %v244
        %v325 = vunpack.c.l.b16 %v245
        %v326 = vunpack.c.l.b16 %v246
        %v327 = vunpack.c.l.b16 %v247
        %v328 = vunpack.c.l.b16 %v248
        %v329 = vunpack.c.l.b16 %v249
        %v330 = vunpack.c.l.b16 %v250
        %v331 = vunpack.c.l.b16 %v251
        %v332 = vunpack.c.l.b16 %v252
        %v333 = vunpack.c.l.b16 %v253
        %v334 = vunpack.c.l.b16 %v254
        %v335 = vunpack.c.l.b16 %v255
        %v336 = vunpack.c.l.b16 %v256
        %v337 = vpack.c.b16 %v322, %v321
        %v338 = vpack.c.b16 %v324, %v323
        %v339 = vpack.c.b16 %v326, %v325
        %v340 = vpack.c.b16 %v328, %v327
        %v341 = vpack.c.b16 %v330, %v329
        %v342 = vpack.c.b16 %v332, %v331
        %v343 = vpack.c.b16 %v334, %v333
        %v344 = vpack.c.b16 %v336, %v335
        %353 = vmatprep.subr.bf16.mxu0 0
        %354 = vmatpush1.bf16.msra.mxu0 %v344
        %355 = vmatprep.subr.bf16.mxu0 0
        %356 = vmatpush1.bf16.msra.mxu0 %v343
        %357 = vmatprep.subr.bf16.mxu0 0
        %358 = vmatpush1.bf16.msra.mxu0 %v342
        %359 = vmatprep.subr.bf16.mxu0 0
        %360 = vmatpush1.bf16.msra.mxu0 %v341
        %361 = vmatprep.subr.bf16.mxu0 0
        %362 = vmatpush1.bf16.msra.mxu0 %v340
        %363 = vmatprep.subr.bf16.mxu0 0
        %364 = vmatpush1.bf16.msra.mxu0 %v339
        %365 = vmatprep.subr.bf16.mxu0 0
        %366 = vmatpush1.bf16.msra.mxu0 %v338
        %367 = vmatprep.subr.bf16.mxu0 0
        %368 = vmatpush1.bf16.msra.mxu0 %v337
        %369 = vmatprep.subr.bf16.mxu0 0
        %370 = vmatpush2.bf16.msra.mxu0 0
        %371 = vmatprep.subr.bf16.mxu0 0
        %372 = vmatpush2.bf16.msra.mxu0 0
        %373 = vmatprep.subr.bf16.mxu0 0
        %374 = vmatpush2.bf16.msra.mxu0 0
        %375 = vmatprep.subr.bf16.mxu0 0
        %376 = vmatpush2.bf16.msra.mxu0 0
        %377 = vmatprep.subr.bf16.mxu0 0
        %378 = vmatpush2.bf16.msra.mxu0 0
        %379 = vmatprep.subr.bf16.mxu0 0
        %380 = vmatpush2.bf16.msra.mxu0 0
        %381 = vmatprep.subr.bf16.mxu0 0
        %382 = vmatpush2.bf16.msra.mxu0 0
        %383 = vmatprep.subr.bf16.mxu0 0
        %384 = vmatpush2.bf16.msra.mxu0 0
        %385 = vmatprep.mubr.bf16.mxu0 0
        %386 = vmatmul.mubr.bf16.gmra.mxu0 %v289
        %v387 = vpop.f32.mrf.mxu0
        %v388 = vadd.f32 0.0, %v387
        %v389 = vpop.f32.mrf.mxu0
        %v390 = vpop.f32.mrf.mxu0
        %v391 = vadd.f32 0.0, %v390
        %v392 = vpop.f32.mrf.mxu0
        %393 = vmatprep.mubr.bf16.mxu0 0
        %394 = vmatmul.mubr.bf16.gmra.mxu0 %v290
        %v395 = vpop.f32.mrf.mxu0
        %v396 = vadd.f32 0.0, %v395
        %v397 = vpop.f32.mrf.mxu0
        %v398 = vpop.f32.mrf.mxu0
        %v399 = vadd.f32 0.0, %v398
        %v400 = vpop.f32.mrf.mxu0
        %401 = vmatprep.mubr.bf16.mxu0 0
        %402 = vmatmul.mubr.bf16.gmra.mxu0 %v291
        %v403 = vpop.f32.mrf.mxu0
        %v404 = vadd.f32 0.0, %v403
        %v405 = vpop.f32.mrf.mxu0
        %v406 = vpop.f32.mrf.mxu0
        %v407 = vadd.f32 0.0, %v406
        %v408 = vpop.f32.mrf.mxu0
        %409 = vmatprep.mubr.bf16.mxu0 0
        %410 = vmatmul.mubr.bf16.gmra.mxu0 %v292
        %v411 = vpop.f32.mrf.mxu0
        %v412 = vadd.f32 0.0, %v411
        %v413 = vpop.f32.mrf.mxu0
        %v414 = vpop.f32.mrf.mxu0
        %v415 = vadd.f32 0.0, %v414
        %v416 = vpop.f32.mrf.mxu0
        %417 = vmatprep.mubr.bf16.mxu0 0
        %418 = vmatmul.mubr.bf16.gmra.mxu0 %v293
        %v419 = vpop.f32.mrf.mxu0
        %v420 = vadd.f32 0.0, %v419
        %v421 = vpop.f32.mrf.mxu0
        %v422 = vpop.f32.mrf.mxu0
        %v423 = vadd.f32 0.0, %v422
        %v424 = vpop.f32.mrf.mxu0
        %425 = vmatprep.mubr.bf16.mxu0 0
        %426 = vmatmul.mubr.bf16.gmra.mxu0 %v294
        %v427 = vpop.f32.mrf.mxu0
        %v428 = vadd.f32 0.0, %v427
        %v429 = vpop.f32.mrf.mxu0
        %v430 = vpop.f32.mrf.mxu0
        %v431 = vadd.f32 0.0, %v430
        %v432 = vpop.f32.mrf.mxu0
        %433 = vmatprep.mubr.bf16.mxu0 0
        %434 = vmatmul.mubr.bf16.gmra.mxu0 %v295
        %v435 = vpop.f32.mrf.mxu0
        %v436 = vadd.f32 0.0, %v435
        %v437 = vpop.f32.mrf.mxu0
        %v438 = vpop.f32.mrf.mxu0
        %v439 = vadd.f32 0.0, %v438
        %v440 = vpop.f32.mrf.mxu0
        %441 = vmatprep.mubr.bf16.mxu0 0
        %442 = vmatmul.mubr.bf16.gmra.mxu0 %v296
        %v443 = vpop.f32.mrf.mxu0
        %v444 = vadd.f32 0.0, %v443
        %v445 = vpop.f32.mrf.mxu0
        %v446 = vpop.f32.mrf.mxu0
        %v447 = vadd.f32 0.0, %v446
        %v448 = vpop.f32.mrf.mxu0
        %449 = vdwg.mxu0
        %v450 = vld [vmem:[%s2] sm:$0x1]
        %v451 = vlaneseq
        %v452 = vshrl.u32 %v451, 7
        %v453 = vsub.s32 0, %v452
        %v454 = vrot.slane %v450, %v453
        %v455 = vmul.f32 %v388, %v454
        %v456 = vmul.f32 %v391, %v454
        %v457 = vmul.f32 %v396, %v454
        %v458 = vmul.f32 %v399, %v454
        %v459 = vmul.f32 %v404, %v454
        %v460 = vmul.f32 %v407, %v454
        %v461 = vmul.f32 %v412, %v454
        %v462 = vmul.f32 %v415, %v454
        %v463 = vmul.f32 %v420, %v454
        %v464 = vmul.f32 %v423, %v454
        %v465 = vmul.f32 %v428, %v454
        %v466 = vmul.f32 %v431, %v454
        %v467 = vmul.f32 %v436, %v454
        %v468 = vmul.f32 %v439, %v454
        %v469 = vmul.f32 %v444, %v454
        %v470 = vmul.f32 %v447, %v454
        %v471 = vld [vmem:[%s2 + $0x1] sm:$0x1]
        %v472 = vlaneseq
        %v473 = vshrl.u32 %v472, 7
        %v474 = vsub.s32 0, %v473
        %v475 = vrot.slane %v471, %v474
        %v476 = vadd.f32 %v455, %v475
        %v477 = vadd.f32 %v456, %v475
        %v478 = vadd.f32 %v457, %v475
        %v479 = vadd.f32 %v458, %v475
        %v480 = vadd.f32 %v459, %v475
        %v481 = vadd.f32 %v460, %v475
        %v482 = vadd.f32 %v461, %v475
        %v483 = vadd.f32 %v462, %v475
        %v484 = vadd.f32 %v463, %v475
        %v485 = vadd.f32 %v464, %v475
        %v486 = vadd.f32 %v465, %v475
        %v487 = vadd.f32 %v466, %v475
        %v488 = vadd.f32 %v467, %v475
        %v489 = vadd.f32 %v468, %v475
        %v490 = vadd.f32 %v469, %v475
        %v491 = vadd.f32 %v470, %v475
        %v492 = vmax.f32 %v476, 0.0
        %v493 = vmax.f32 %v477, 0.0
        %v494 = vmax.f32 %v478, 0.0
        %v495 = vmax.f32 %v479, 0.0
        %v496 = vmax.f32 %v480, 0.0
        %v497 = vmax.f32 %v481, 0.0
        %v498 = vmax.f32 %v482, 0.0
        %v499 = vmax.f32 %v483, 0.0
        %v500 = vmax.f32 %v484, 0.0
        %v501 = vmax.f32 %v485, 0.0
        %v502 = vmax.f32 %v486, 0.0
        %v503 = vmax.f32 %v487, 0.0
        %v504 = vmax.f32 %v488, 0.0
        %v505 = vmax.f32 %v489, 0.0
        %v506 = vmax.f32 %v490, 0.0
        %v507 = vmax.f32 %v491, 0.0
        %508 = vst [vmem:[%s221] sm:$0xff] %v492
        %509 = vst [vmem:[%s221 + $0x8] sm:$0xff] %v493
        %510 = vst [vmem:[%s221 + $0x10] sm:$0xff] %v494
        %511 = vst [vmem:[%s221 + $0x18] sm:$0xff] %v495
        %512 = vst [vmem:[%s221 + $0x20] sm:$0xff] %v496
        %513 = vst [vmem:[%s221 + $0x28] sm:$0xff] %v497
        %514 = vst [vmem:[%s221 + $0x30] sm:$0xff] %v498
        %515 = vst [vmem:[%s221 + $0x38] sm:$0xff] %v499
        %516 = vst [vmem:[%s221 + $0x40] sm:$0xff] %v500
        %517 = vst [vmem:[%s221 + $0x48] sm:$0xff] %v501
        %518 = vst [vmem:[%s221 + $0x50] sm:$0xff] %v502
        %519 = vst [vmem:[%s221 + $0x58] sm:$0xff] %v503
        %520 = vst [vmem:[%s221 + $0x60] sm:$0xff] %v504
        %521 = vst [vmem:[%s221 + $0x68] sm:$0xff] %v505
        %522 = vst [vmem:[%s221 + $0x70] sm:$0xff] %v506
        %523 = vst [vmem:[%s221 + $0x78] sm:$0xff] %v507
        %s524 = sand.u32 %s113, 1
        %s525 = scalar_lea.sflag [#allocation4], %s524
        %s526 = sand.u32 %s113, 1
        %s527 = smul.addr %s526, 128
        %s528 = scalar_lea.vmem [#allocation7], %s527
        // Predicated region
        $region41: #{tpu_custom_call.1} parent=31 // pred_check
          %p529 = pneg %p123
        $region42: #{tpu_custom_call.1} parent=31 // pred_check_branch
          %531 = sbr.rel (%p529) target = $region44
        $region43: #{tpu_custom_call.1} parent=31 // pred_region
          %s532 = smul.u32 16, %s26
          %s534 = ssub.s32 2048, 2048
          %535 = vsyncadd %s525, %s534
          %s536 = smul.addr %s25, 32
          %s537 = sadd.s32 %s532, %s536
          %s538 = smul.addr %s537, 128
          %s539 = scalar_lea.hbm %s3, %s538
          %s540 = sshll.u32 %s528, 4
          %s541 = int_to_ptr.vmem [resolvable:$true] %s540
          %546 = dma.vmem_to_hbm [thread:$0]  %s541, 2048, %s539, %s525, 128, 128, 8
        $region44: #{tpu_custom_call.1} parent=31 // pred_fallthru
          _
      $region32: #{tpu_custom_call.1} parent=5 // pred_fallthru
        _
      %p547 = scmp.le.s32.totalorder 2, %s16
      // Predicated region
      $region45: #{tpu_custom_call.1} parent=5 // pred_check
        %p548 = pneg %p547
      $region46: #{tpu_custom_call.1} parent=5 // pred_check_branch
        %550 = sbr.rel (%p548) target = $region48
      $region47: #{tpu_custom_call.1} parent=5 // pred_region
        %s551 = ssub.s32 %s16, 2
        // Predicated region
        $region49: #{tpu_custom_call.1} parent=47 // pred_check
          %p552 = pneg %p129
        $region50: #{tpu_custom_call.1} parent=47 // pred_check_branch
          %554 = sbr.rel (%p552) target = $region52
        $region51: #{tpu_custom_call.1} parent=47 // pred_region
          %s555 = sand.u32 %s114, 1
          %s556 = scalar_lea.sflag [#allocation4], %s555
          %s557 = sand.u32 %s114, 1
          %s558 = smul.addr %s557, 128
          %s559 = scalar_lea.vmem [#allocation7], %s558
          %560 = dma.done %s556, 2048
        $region52: #{tpu_custom_call.1} parent=47 // pred_fallthru
          _
      $region48: #{tpu_custom_call.1} parent=5 // pred_fallthru
        _
    $region6: #{tpu_custom_call.1} parent=1 // loop_footer
      %s20 = sadd.s32 1, %s16
    $region7: #{tpu_custom_call.1} parent=1 // loop_footer_branch
      %15 = sbr.rel target = $region3
    $region8: #{tpu_custom_call.1} parent=1 // loop_exit
      _
    %561 = vsyncpa [#allocation3], 1
    %s562 = scalar_lea.sflag [#allocation3], 1
    %563 = vsyncpa %s562, 1
    %564 = vsyncpa [#allocation6], 1
    %565 = vsyncpa [#allocation4], 1
    %s566 = scalar_lea.sflag [#allocation4], 1
    %567 = vsyncpa %s566, 1

</llo_original>
